<compile_context>
chip_gen: v7x
topology: tpu7x:2x2x1
jax: 0.10.0
libtpu: 0.0.40
codegen_flags: <defaults>
</compile_context>

<pallas_src>
import functools

import jax
import jax.numpy as jnp
from jax.experimental import pallas as pl
from jax.experimental.pallas import tpu as pltpu


def _fused_mlp_kernel(*refs, n_layers: int):
    """refs = (x, w0, b0, w1, b1, ..., w{n-1}, b{n-1}, out)."""
    x_ref = refs[0]
    o_ref = refs[-1]
    wb = refs[1:-1]

    # Keep the running activation in f32 vregs for the whole chain.
    h = x_ref[...].astype(jnp.float32)
    for i in range(n_layers):
        w = wb[2 * i][...].astype(jnp.float32)       # [Din_i, Dout_i]
        b = wb[2 * i + 1][...].astype(jnp.float32)   # [1, Dout_i] -> broadcasts
        h = jnp.dot(h, w, preferred_element_type=jnp.float32) + b
        if i < n_layers - 1:                         # final layer: no ReLU
            h = jnp.maximum(h, 0.0)

    # Single cast + single (small) store of the final result only.
    o_ref[...] = h.astype(o_ref.dtype)


def _fused_mlp(x, flat_params, n_layers, out_dim):
    """x: [B, Din0]; flat_params: (w0, b0, ..., w{n-1}, b{n-1}); -> [B, out_dim]."""
    B = x.shape[0]
    kernel = functools.partial(_fused_mlp_kernel, n_layers=n_layers)
    vmem = pl.BlockSpec(memory_space=pltpu.MemorySpace.VMEM)
    return pl.pallas_call(
        kernel,
        out_shape=jax.ShapeDtypeStruct((B, out_dim), x.dtype),
        # Whole-array VMEM operands, single grid step: nothing to pipeline.
        in_specs=[vmem] * (1 + len(flat_params)),
        out_specs=vmem,
    )(x, *flat_params)


@jax.jit
def mlp_forward(x, params):
    """Matches Model.forward: [Linear, ReLU] * (layers-1) then final Linear."""
    flat = []
    for w, b in params:
        flat.append(w)
        flat.append(b)  # already [1, Dout]
    out_dim = params[-1][0].shape[1]
    return _fused_mlp(x, tuple(flat), len(params), out_dim)


def init_mlp_params(key, d, hidden_dim, layers, dtype=jnp.float32):
    """Deterministic init mimicking PyTorch nn.Linear default (uniform +/- 1/sqrt(fan_in)).

    Weights are pre-packed as [fan_in, fan_out]; biases as [1, fan_out] so the
    fused kernel gets its operands with no per-call reshapes.
    """
    dims = [d + 1] + [hidden_dim] * (layers - 1) + [d]
    params = []
    for i in range(len(dims) - 1):
        fan_in, fan_out = dims[i], dims[i + 1]
        key, kw, kb = jax.random.split(key, 3)
        bound = 1.0 / jnp.sqrt(jnp.array(fan_in, dtype=jnp.float32))
        w = jax.random.uniform(kw, (fan_in, fan_out), dtype, -bound, bound)
        b = jax.random.uniform(kb, (1, fan_out), dtype, -bound, bound)
        params.append((w, b))
    return params


if __name__ == "__main__":
    # Module hyper-params (args.layers, args.hidden_dim, d)
    layers = 4
    hidden_dim = 32
    d = 3
    batch = 8

    key = jax.random.PRNGKey(0)
    key, kx = jax.random.split(key)
    x = jax.random.normal(kx, (batch, d + 1), dtype=jnp.float32)

    params = init_mlp_params(key, d, hidden_dim, layers)

    out = mlp_forward(x, params)
    out = jax.block_until_ready(out)

    # Sanity check against a pure-JAX reference.
    ref = x
    for i, (w, b) in enumerate(params):
        ref = ref @ w + b
        if i < len(params) - 1:
            ref = jnp.maximum(ref, 0.0)
    assert out.shape == (batch, d)
    assert jnp.allclose(out, ref, atol=1e-5, rtol=1e-5)

    print("KERNEL_OK")
</pallas_src>

<mosaic_0001>
module attributes {stable_mosaic.version = 11 : i64} {
  func.func @_fused_mlp_kernel(%arg0: memref<8x4xf32, #tpu.memory_space<vmem>>, %arg1: memref<4x32xf32, #tpu.memory_space<vmem>>, %arg2: memref<1x32xf32, #tpu.memory_space<vmem>>, %arg3: memref<32x32xf32, #tpu.memory_space<vmem>>, %arg4: memref<1x32xf32, #tpu.memory_space<vmem>>, %arg5: memref<32x32xf32, #tpu.memory_space<vmem>>, %arg6: memref<1x32xf32, #tpu.memory_space<vmem>>, %arg7: memref<32x3xf32, #tpu.memory_space<vmem>>, %arg8: memref<1x3xf32, #tpu.memory_space<vmem>>, %arg9: memref<8x3xf32, #tpu.memory_space<vmem>>) attributes {dimension_semantics = [], scalar_prefetch = 0 : i64, scratch_operands = 0 : i64, tpu.core_type = #tpu.core_type<tc>} {
    %c0 = arith.constant 0 : index
    %c0_0 = arith.constant 0 : index
    %0 = vector.load %arg0[%c0, %c0_0] : memref<8x4xf32, #tpu.memory_space<vmem>>, vector<8x4xf32>
    %c0_1 = arith.constant 0 : index
    %c0_2 = arith.constant 0 : index
    %1 = vector.load %arg1[%c0_1, %c0_2] : memref<4x32xf32, #tpu.memory_space<vmem>>, vector<4x32xf32>
    %c0_3 = arith.constant 0 : index
    %c0_4 = arith.constant 0 : index
    %2 = vector.load %arg2[%c0_3, %c0_4] : memref<1x32xf32, #tpu.memory_space<vmem>>, vector<1x32xf32>
    %cst = arith.constant dense<0.000000e+00> : vector<8x32xf32>
    %3 = tpu.matmul %0, %1, %cst {dimension_numbers = #tpu.dot_dimension_numbers<[1], [0], [0], [1], [0, 0, 1, 1], [], []>} : vector<8x4xf32>, vector<4x32xf32>, vector<8x32xf32> -> vector<8x32xf32>
    %4 = vector.broadcast %2 : vector<1x32xf32> to vector<8x32xf32>
    %5 = arith.addf %3, %4 : vector<8x32xf32>
    %cst_5 = arith.constant 0.000000e+00 : f32
    %6 = vector.broadcast %cst_5 : f32 to vector<8x32xf32>
    %7 = arith.maximumf %5, %6 : vector<8x32xf32>
    %c0_6 = arith.constant 0 : index
    %c0_7 = arith.constant 0 : index
    %8 = vector.load %arg3[%c0_6, %c0_7] : memref<32x32xf32, #tpu.memory_space<vmem>>, vector<32x32xf32>
    %c0_8 = arith.constant 0 : index
    %c0_9 = arith.constant 0 : index
    %9 = vector.load %arg4[%c0_8, %c0_9] : memref<1x32xf32, #tpu.memory_space<vmem>>, vector<1x32xf32>
    %cst_10 = arith.constant dense<0.000000e+00> : vector<8x32xf32>
    %10 = tpu.matmul %7, %8, %cst_10 {dimension_numbers = #tpu.dot_dimension_numbers<[1], [0], [0], [1], [0, 0, 1, 1], [], []>} : vector<8x32xf32>, vector<32x32xf32>, vector<8x32xf32> -> vector<8x32xf32>
    %11 = vector.broadcast %9 : vector<1x32xf32> to vector<8x32xf32>
    %12 = arith.addf %10, %11 : vector<8x32xf32>
    %cst_11 = arith.constant 0.000000e+00 : f32
    %13 = vector.broadcast %cst_11 : f32 to vector<8x32xf32>
    %14 = arith.maximumf %12, %13 : vector<8x32xf32>
    %c0_12 = arith.constant 0 : index
    %c0_13 = arith.constant 0 : index
    %15 = vector.load %arg5[%c0_12, %c0_13] : memref<32x32xf32, #tpu.memory_space<vmem>>, vector<32x32xf32>
    %c0_14 = arith.constant 0 : index
    %c0_15 = arith.constant 0 : index
    %16 = vector.load %arg6[%c0_14, %c0_15] : memref<1x32xf32, #tpu.memory_space<vmem>>, vector<1x32xf32>
    %cst_16 = arith.constant dense<0.000000e+00> : vector<8x32xf32>
    %17 = tpu.matmul %14, %15, %cst_16 {dimension_numbers = #tpu.dot_dimension_numbers<[1], [0], [0], [1], [0, 0, 1, 1], [], []>} : vector<8x32xf32>, vector<32x32xf32>, vector<8x32xf32> -> vector<8x32xf32>
    %18 = vector.broadcast %16 : vector<1x32xf32> to vector<8x32xf32>
    %19 = arith.addf %17, %18 : vector<8x32xf32>
    %cst_17 = arith.constant 0.000000e+00 : f32
    %20 = vector.broadcast %cst_17 : f32 to vector<8x32xf32>
    %21 = arith.maximumf %19, %20 : vector<8x32xf32>
    %c0_18 = arith.constant 0 : index
    %c0_19 = arith.constant 0 : index
    %22 = vector.load %arg7[%c0_18, %c0_19] : memref<32x3xf32, #tpu.memory_space<vmem>>, vector<32x3xf32>
    %c0_20 = arith.constant 0 : index
    %c0_21 = arith.constant 0 : index
    %23 = vector.load %arg8[%c0_20, %c0_21] : memref<1x3xf32, #tpu.memory_space<vmem>>, vector<1x3xf32>
    %cst_22 = arith.constant dense<0.000000e+00> : vector<8x3xf32>
    %24 = tpu.matmul %21, %22, %cst_22 {dimension_numbers = #tpu.dot_dimension_numbers<[1], [0], [0], [1], [0, 0, 1, 1], [], []>} : vector<8x32xf32>, vector<32x3xf32>, vector<8x3xf32> -> vector<8x3xf32>
    %25 = vector.broadcast %23 : vector<1x3xf32> to vector<8x3xf32>
    %26 = arith.addf %24, %25 : vector<8x3xf32>
    %c0_23 = arith.constant 0 : index
    %c0_24 = arith.constant 0 : index
    %27 = vector.load %arg9[%c0_23, %c0_24] : memref<8x3xf32, #tpu.memory_space<vmem>>, vector<8x3xf32>
    tpu.vector_store %arg9[%c0_23, %c0_24], %26 {strides = array<i32>} : memref<8x3xf32, #tpu.memory_space<vmem>>, vector<8x3xf32>,
    return
  }
}

</mosaic_0001>

<llo_original>
// kernel: mlp_forward.1
$region0: #{mlp_forward.1}
  #allocation0 [shape = 'u32[]', space=smem, size = 0x4, offset = 0x4, fixed_abs, tag = 'smem constant byte address 0x4 - core index']
  #allocation1 [shape = 'u32[144,128]{1,0:T(1,128)}', space=vmem, size = 0x12000, scoped, tag = 'internal scratch']
  %s0 = inlined_call_operand.vmem [shape: f32[8,4], index: 0, kind: input, shape index: {}]
  %s1 = inlined_call_operand.hbm [shape: f32[4,32], index: 1, kind: input, shape index: {}]
  %s2 = inlined_call_operand.vmem [shape: f32[1,32], index: 2, kind: input, shape index: {}]
  %s3 = inlined_call_operand.vmem [shape: f32[32,32], index: 3, kind: input, shape index: {}]
  %s4 = inlined_call_operand.vmem [shape: f32[1,32], index: 4, kind: input, shape index: {}]
  %s5 = inlined_call_operand.vmem [shape: f32[32,32], index: 5, kind: input, shape index: {}]
  %s6 = inlined_call_operand.hbm [shape: f32[1,32], index: 6, kind: input, shape index: {}]
  %s7 = inlined_call_operand.vmem [shape: f32[32,3], index: 7, kind: input, shape index: {}]
  %s8 = inlined_call_operand.vmem [shape: f32[1,3], index: 8, kind: input, shape index: {}]
  %s9 = inlined_call_operand.vmem [shape: f32[8,3], index: 9, kind: output, shape index: {}]
  %s10 = sld [smem:[#allocation0]]
  $region54: #{mlp_forward.1} parent=0
    _
  %s12 = ssub.s32 1, %s10
  %s13 = scalar_select 0, %s12, %s10
  $region1: #{mlp_forward.1} parent=0
    #allocation2 [shape = 'u8[2048]{0}', space=vmem, size = 0x800, scoped, tag = 'input window, operand 1, single buffered']
    #allocation3 [shape = 's32[1]{0}', space=sflag, size = 0x4, scoped, tag = 'scoped memory for mlp_forward.1']
    #allocation4 [shape = 'u8[512]{0}', space=vmem, size = 0x400, scoped, tag = 'input window, operand 6, single buffered']
    #allocation5 [shape = 's32[1]{0}', space=sflag, size = 0x4, scoped, tag = 'scoped memory for mlp_forward.1']
    %14 = vsyncpa [#allocation3], 0
    %15 = vsyncpa [#allocation5], 0
    // Predicated region
    $region2: #{mlp_forward.1} parent=1 // pred_check
      _
    $region3: #{mlp_forward.1} parent=1 // pred_check_branch
      %17 = sbr.rel (0) target = $region5
    $region4: #{mlp_forward.1} parent=1 // pred_region
      _
    $region5: #{mlp_forward.1} parent=1 // pred_fallthru
      _
    // Predicated region
    $region6: #{mlp_forward.1} parent=1 // pred_check
      _
    $region7: #{mlp_forward.1} parent=1 // pred_check_branch
      %19 = sbr.rel (0) target = $region9
    $region8: #{mlp_forward.1} parent=1 // pred_region
      %s21 = ssub.s32 64, 64
      %22 = vsyncadd [#allocation3], %s21
      %s24 = sshll.u32 [#allocation2], 4
      %s25 = int_to_ptr.vmem [resolvable:$true] %s24
      %27 = dma.hbm_to_vmem [thread:$0]  %s1, 64, %s25, [#allocation3]
    $region9: #{mlp_forward.1} parent=1 // pred_fallthru
      _
    // Predicated region
    $region10: #{mlp_forward.1} parent=1 // pred_check
      _
    $region11: #{mlp_forward.1} parent=1 // pred_check_branch
      %29 = sbr.rel (0) target = $region13
    $region12: #{mlp_forward.1} parent=1 // pred_region
      _
    $region13: #{mlp_forward.1} parent=1 // pred_fallthru
      _
    // Predicated region
    $region14: #{mlp_forward.1} parent=1 // pred_check
      _
    $region15: #{mlp_forward.1} parent=1 // pred_check_branch
      %31 = sbr.rel (0) target = $region17
    $region16: #{mlp_forward.1} parent=1 // pred_region
      _
    $region17: #{mlp_forward.1} parent=1 // pred_fallthru
      _
    // Predicated region
    $region18: #{mlp_forward.1} parent=1 // pred_check
      _
    $region19: #{mlp_forward.1} parent=1 // pred_check_branch
      %33 = sbr.rel (0) target = $region21
    $region20: #{mlp_forward.1} parent=1 // pred_region
      _
    $region21: #{mlp_forward.1} parent=1 // pred_fallthru
      _
    // Predicated region
    $region22: #{mlp_forward.1} parent=1 // pred_check
      _
    $region23: #{mlp_forward.1} parent=1 // pred_check_branch
      %35 = sbr.rel (0) target = $region25
    $region24: #{mlp_forward.1} parent=1 // pred_region
      _
    $region25: #{mlp_forward.1} parent=1 // pred_fallthru
      _
    // Predicated region
    $region26: #{mlp_forward.1} parent=1 // pred_check
      _
    $region27: #{mlp_forward.1} parent=1 // pred_check_branch
      %37 = sbr.rel (0) target = $region29
    $region28: #{mlp_forward.1} parent=1 // pred_region
      %s39 = ssub.s32 16, 16
      %40 = vsyncadd [#allocation5], %s39
      %s42 = sshll.u32 [#allocation4], 4
      %s43 = int_to_ptr.vmem [resolvable:$true] %s42
      %45 = dma.hbm_to_vmem [thread:$0]  %s6, 16, %s43, [#allocation5]
    $region29: #{mlp_forward.1} parent=1 // pred_fallthru
      _
    // Predicated region
    $region30: #{mlp_forward.1} parent=1 // pred_check
      _
    $region31: #{mlp_forward.1} parent=1 // pred_check_branch
      %47 = sbr.rel (0) target = $region33
    $region32: #{mlp_forward.1} parent=1 // pred_region
      _
    $region33: #{mlp_forward.1} parent=1 // pred_fallthru
      _
    // Predicated region
    $region34: #{mlp_forward.1} parent=1 // pred_check
      _
    $region35: #{mlp_forward.1} parent=1 // pred_check_branch
      %49 = sbr.rel (0) target = $region37
    $region36: #{mlp_forward.1} parent=1 // pred_region
      _
    $region37: #{mlp_forward.1} parent=1 // pred_fallthru
      _
    // Predicated region
    $region38: #{mlp_forward.1} parent=1 // pred_check
      _
    $region39: #{mlp_forward.1} parent=1 // pred_check_branch
      %51 = sbr.rel (0) target = $region41
    $region40: #{mlp_forward.1} parent=1 // pred_region
      %52 = dma.done [#allocation3], 64
    $region41: #{mlp_forward.1} parent=1 // pred_fallthru
      _
    // Predicated region
    $region42: #{mlp_forward.1} parent=1 // pred_check
      _
    $region43: #{mlp_forward.1} parent=1 // pred_check_branch
      %54 = sbr.rel (0) target = $region45
    $region44: #{mlp_forward.1} parent=1 // pred_region
      %55 = dma.done [#allocation5], 16
    $region45: #{mlp_forward.1} parent=1 // pred_fallthru
      _
    %v56 = vld [vmem:[%s0] sm:$0xff]
    %v57 = vld [vmem:[#allocation2] sm:$0xf]
    %v58 = vld [vmem:[%s2] sm:$0x1]
    %v60 = vlaneseq
    %v61 = vshrl.u32 %v60, 7
    %v62 = vsub.s32 0, %v61
    %v63 = vrot.slane %v58, %v62
    %vm65 = vcmask 31744
    %v67 = vsel %vm65, %v56, 0
    %vm69 = vcmask 1043456
    %v71 = vsel %vm69, %v57, 0
    %73 = vmatprep.subr.mxu0 0.0
    %74 = vmatpush1.msra.mxu0 %v71
    %75 = vmatprep.subr.mxu0 0.0
    %76 = vmatpush1.msra.mxu0 0.0
    %77 = vmatprep.subr.mxu0 0.0
    %78 = vmatpush1.msra.mxu0 0.0
    %79 = vmatprep.subr.mxu0 0.0
    %80 = vmatpush1.msra.mxu0 0.0
    %81 = vmatprep.subr.mxu0 0.0
    %82 = vmatpush1.msra.mxu0 0.0
    %83 = vmatprep.subr.mxu0 0.0
    %84 = vmatpush1.msra.mxu0 0.0
    %85 = vmatprep.subr.mxu0 0.0
    %86 = vmatpush1.msra.mxu0 0.0
    %87 = vmatprep.subr.mxu0 0.0
    %88 = vmatpush1.msra.mxu0 0.0
    %89 = vmatprep.subr.mxu0 0.0
    %90 = vmatpush1.msra.mxu0 0.0
    %91 = vmatprep.subr.mxu0 0.0
    %92 = vmatpush1.msra.mxu0 0.0
    %93 = vmatprep.subr.mxu0 0.0
    %94 = vmatpush1.msra.mxu0 0.0
    %95 = vmatprep.subr.mxu0 0.0
    %96 = vmatpush1.msra.mxu0 0.0
    %97 = vmatprep.subr.mxu0 0.0
    %98 = vmatpush1.msra.mxu0 0.0
    %99 = vmatprep.subr.mxu0 0.0
    %100 = vmatpush1.msra.mxu0 0.0
    %101 = vmatprep.subr.mxu0 0.0
    %102 = vmatpush1.msra.mxu0 0.0
    %103 = vmatprep.subr.mxu0 0.0
    %104 = vmatpush1.msra.mxu0 0.0
    %105 = vmatprep.subr.mxu0 0.0
    %106 = vmatpush1.msra.mxu0 0.0
    %107 = vmatprep.subr.mxu0 0.0
    %108 = vmatpush1.msra.mxu0 0.0
    %109 = vmatprep.subr.mxu0 0.0
    %110 = vmatpush1.msra.mxu0 0.0
    %111 = vmatprep.subr.mxu0 0.0
    %112 = vmatpush1.msra.mxu0 0.0
    %113 = vmatprep.subr.mxu0 0.0
    %114 = vmatpush1.msra.mxu0 0.0
    %115 = vmatprep.subr.mxu0 0.0
    %116 = vmatpush1.msra.mxu0 0.0
    %117 = vmatprep.subr.mxu0 0.0
    %118 = vmatpush1.msra.mxu0 0.0
    %119 = vmatprep.subr.mxu0 0.0
    %120 = vmatpush1.msra.mxu0 0.0
    %121 = vmatprep.subr.mxu0 0.0
    %122 = vmatpush1.msra.mxu0 0.0
    %123 = vmatprep.subr.mxu0 0.0
    %124 = vmatpush1.msra.mxu0 0.0
    %125 = vmatprep.subr.mxu0 0.0
    %126 = vmatpush1.msra.mxu0 0.0
    %127 = vmatprep.subr.mxu0 0.0
    %128 = vmatpush1.msra.mxu0 0.0
    %129 = vmatprep.subr.mxu0 0.0
    %130 = vmatpush1.msra.mxu0 0.0
    %131 = vmatprep.subr.mxu0 0.0
    %132 = vmatpush1.msra.mxu0 0.0
    %133 = vmatprep.subr.mxu0 0.0
    %134 = vmatpush1.msra.mxu0 0.0
    %135 = vmatprep.subr.mxu0 0.0
    %136 = vmatpush1.msra.mxu0 0.0
    %137 = vmatprep.mubr.f32.mxu0 0.0
    %138 = vmatmul.mubr.f32.gmra.mrb[0].mxu0 %v67
    %v139 = vpop.f32.mrb[0].mxu0
    %v140 = vadd.f32 %v63, %v139
    %v141 = vpop.f32.mrb[0].mxu0
    %142 = vdwg.mxu0
    %v143 = vmax.f32 %v140, 0.0
    %v144 = vld [vmem:[%s3] sm:$0xff]
    %v145 = vld [vmem:[%s3 + $0x8] sm:$0xff]
    %v146 = vld [vmem:[%s3 + $0x10] sm:$0xff]
    %v147 = vld [vmem:[%s3 + $0x18] sm:$0xff]
    %v148 = vld [vmem:[%s4] sm:$0x1]
    %v150 = vlaneseq
    %v151 = vshrl.u32 %v150, 7
    %v152 = vsub.s32 0, %v151
    %v153 = vrot.slane %v148, %v152
    %vm155 = vcmask 261120
    %v157 = vsel %vm155, %v143, 0
    %159 = vmatprep.subr.mxu0 0.0
    %160 = vmatpush1.msra.mxu0 %v144
    %161 = vmatprep.subr.mxu0 0.0
    %162 = vmatpush1.msra.mxu0 %v145
    %163 = vmatprep.subr.mxu0 0.0
    %164 = vmatpush1.msra.mxu0 %v146
    %165 = vmatprep.subr.mxu0 0.0
    %166 = vmatpush1.msra.mxu0 %v147
    %167 = vmatprep.subr.mxu0 0.0
    %168 = vmatpush1.msra.mxu0 0.0
    %169 = vmatprep.subr.mxu0 0.0
    %170 = vmatpush1.msra.mxu0 0.0
    %171 = vmatprep.subr.mxu0 0.0
    %172 = vmatpush1.msra.mxu0 0.0
    %173 = vmatprep.subr.mxu0 0.0
    %174 = vmatpush1.msra.mxu0 0.0
    %175 = vmatprep.subr.mxu0 0.0
    %176 = vmatpush1.msra.mxu0 0.0
    %177 = vmatprep.subr.mxu0 0.0
    %178 = vmatpush1.msra.mxu0 0.0
    %179 = vmatprep.subr.mxu0 0.0
    %180 = vmatpush1.msra.mxu0 0.0
    %181 = vmatprep.subr.mxu0 0.0
    %182 = vmatpush1.msra.mxu0 0.0
    %183 = vmatprep.subr.mxu0 0.0
    %184 = vmatpush1.msra.mxu0 0.0
    %185 = vmatprep.subr.mxu0 0.0
    %186 = vmatpush1.msra.mxu0 0.0
    %187 = vmatprep.subr.mxu0 0.0
    %188 = vmatpush1.msra.mxu0 0.0
    %189 = vmatprep.subr.mxu0 0.0
    %190 = vmatpush1.msra.mxu0 0.0
    %191 = vmatprep.subr.mxu0 0.0
    %192 = vmatpush1.msra.mxu0 0.0
    %193 = vmatprep.subr.mxu0 0.0
    %194 = vmatpush1.msra.mxu0 0.0
    %195 = vmatprep.subr.mxu0 0.0
    %196 = vmatpush1.msra.mxu0 0.0
    %197 = vmatprep.subr.mxu0 0.0
    %198 = vmatpush1.msra.mxu0 0.0
    %199 = vmatprep.subr.mxu0 0.0
    %200 = vmatpush1.msra.mxu0 0.0
    %201 = vmatprep.subr.mxu0 0.0
    %202 = vmatpush1.msra.mxu0 0.0
    %203 = vmatprep.subr.mxu0 0.0
    %204 = vmatpush1.msra.mxu0 0.0
    %205 = vmatprep.subr.mxu0 0.0
    %206 = vmatpush1.msra.mxu0 0.0
    %207 = vmatprep.subr.mxu0 0.0
    %208 = vmatpush1.msra.mxu0 0.0
    %209 = vmatprep.subr.mxu0 0.0
    %210 = vmatpush1.msra.mxu0 0.0
    %211 = vmatprep.subr.mxu0 0.0
    %212 = vmatpush1.msra.mxu0 0.0
    %213 = vmatprep.subr.mxu0 0.0
    %214 = vmatpush1.msra.mxu0 0.0
    %215 = vmatprep.subr.mxu0 0.0
    %216 = vmatpush1.msra.mxu0 0.0
    %217 = vmatprep.subr.mxu0 0.0
    %218 = vmatpush1.msra.mxu0 0.0
    %219 = vmatprep.subr.mxu0 0.0
    %220 = vmatpush1.msra.mxu0 0.0
    %221 = vmatprep.subr.mxu0 0.0
    %222 = vmatpush1.msra.mxu0 0.0
    %223 = vmatprep.mubr.f32.mxu0 0.0
    %224 = vmatmul.mubr.f32.gmra.mrb[0].mxu0 %v157
    %v225 = vpop.f32.mrb[0].mxu0
    %v226 = vadd.f32 %v153, %v225
    %v227 = vpop.f32.mrb[0].mxu0
    %228 = vdwg.mxu0
    %v229 = vmax.f32 %v226, 0.0
    %v230 = vld [vmem:[%s5] sm:$0xff]
    %v231 = vld [vmem:[%s5 + $0x8] sm:$0xff]
    %v232 = vld [vmem:[%s5 + $0x10] sm:$0xff]
    %v233 = vld [vmem:[%s5 + $0x18] sm:$0xff]
    %v234 = vld [vmem:[#allocation4] sm:$0x1]
    %v236 = vlaneseq
    %v237 = vshrl.u32 %v236, 7
    %v238 = vsub.s32 0, %v237
    %v239 = vrot.slane %v234, %v238
    %v242 = vsel %vm155, %v229, 0
    %244 = vmatprep.subr.mxu0 0.0
    %245 = vmatpush1.msra.mxu0 %v230
    %246 = vmatprep.subr.mxu0 0.0
    %247 = vmatpush1.msra.mxu0 %v231
    %248 = vmatprep.subr.mxu0 0.0
    %249 = vmatpush1.msra.mxu0 %v232
    %250 = vmatprep.subr.mxu0 0.0
    %251 = vmatpush1.msra.mxu0 %v233
    %252 = vmatprep.subr.mxu0 0.0
    %253 = vmatpush1.msra.mxu0 0.0
    %254 = vmatprep.subr.mxu0 0.0
    %255 = vmatpush1.msra.mxu0 0.0
    %256 = vmatprep.subr.mxu0 0.0
    %257 = vmatpush1.msra.mxu0 0.0
    %258 = vmatprep.subr.mxu0 0.0
    %259 = vmatpush1.msra.mxu0 0.0
    %260 = vmatprep.subr.mxu0 0.0
    %261 = vmatpush1.msra.mxu0 0.0
    %262 = vmatprep.subr.mxu0 0.0
    %263 = vmatpush1.msra.mxu0 0.0
    %264 = vmatprep.subr.mxu0 0.0
    %265 = vmatpush1.msra.mxu0 0.0
    %266 = vmatprep.subr.mxu0 0.0
    %267 = vmatpush1.msra.mxu0 0.0
    %268 = vmatprep.subr.mxu0 0.0
    %269 = vmatpush1.msra.mxu0 0.0
    %270 = vmatprep.subr.mxu0 0.0
    %271 = vmatpush1.msra.mxu0 0.0
    %272 = vmatprep.subr.mxu0 0.0
    %273 = vmatpush1.msra.mxu0 0.0
    %274 = vmatprep.subr.mxu0 0.0
    %275 = vmatpush1.msra.mxu0 0.0
    %276 = vmatprep.subr.mxu0 0.0
    %277 = vmatpush1.msra.mxu0 0.0
    %278 = vmatprep.subr.mxu0 0.0
    %279 = vmatpush1.msra.mxu0 0.0
    %280 = vmatprep.subr.mxu0 0.0
    %281 = vmatpush1.msra.mxu0 0.0
    %282 = vmatprep.subr.mxu0 0.0
    %283 = vmatpush1.msra.mxu0 0.0
    %284 = vmatprep.subr.mxu0 0.0
    %285 = vmatpush1.msra.mxu0 0.0
    %286 = vmatprep.subr.mxu0 0.0
    %287 = vmatpush1.msra.mxu0 0.0
    %288 = vmatprep.subr.mxu0 0.0
    %289 = vmatpush1.msra.mxu0 0.0
    %290 = vmatprep.subr.mxu0 0.0
    %291 = vmatpush1.msra.mxu0 0.0
    %292 = vmatprep.subr.mxu0 0.0
    %293 = vmatpush1.msra.mxu0 0.0
    %294 = vmatprep.subr.mxu0 0.0
    %295 = vmatpush1.msra.mxu0 0.0
    %296 = vmatprep.subr.mxu0 0.0
    %297 = vmatpush1.msra.mxu0 0.0
    %298 = vmatprep.subr.mxu0 0.0
    %299 = vmatpush1.msra.mxu0 0.0
    %300 = vmatprep.subr.mxu0 0.0
    %301 = vmatpush1.msra.mxu0 0.0
    %302 = vmatprep.subr.mxu0 0.0
    %303 = vmatpush1.msra.mxu0 0.0
    %304 = vmatprep.subr.mxu0 0.0
    %305 = vmatpush1.msra.mxu0 0.0
    %306 = vmatprep.subr.mxu0 0.0
    %307 = vmatpush1.msra.mxu0 0.0
    %308 = vmatprep.mubr.f32.mxu0 0.0
    %309 = vmatmul.mubr.f32.gmra.mrb[0].mxu0 %v242
    %v310 = vpop.f32.mrb[0].mxu0
    %v311 = vadd.f32 %v239, %v310
    %v312 = vpop.f32.mrb[0].mxu0
    %313 = vdwg.mxu0
    %v314 = vmax.f32 %v311, 0.0
    %v315 = vld [vmem:[%s7] sm:$0xff]
    %v316 = vld [vmem:[%s7 + $0x8] sm:$0xff]
    %v317 = vld [vmem:[%s7 + $0x10] sm:$0xff]
    %v318 = vld [vmem:[%s7 + $0x18] sm:$0xff]
    %v319 = vld [vmem:[%s8] sm:$0x1]
    %v321 = vlaneseq
    %v322 = vshrl.u32 %v321, 7
    %v323 = vsub.s32 0, %v322
    %v324 = vrot.slane %v319, %v323
    %v327 = vsel %vm155, %v314, 0
    %329 = vmatprep.subr.mxu0 0.0
    %330 = vmatpush1.msra.mxu0 %v315
    %331 = vmatprep.subr.mxu0 0.0
    %332 = vmatpush1.msra.mxu0 %v316
    %333 = vmatprep.subr.mxu0 0.0
    %334 = vmatpush1.msra.mxu0 %v317
    %335 = vmatprep.subr.mxu0 0.0
    %336 = vmatpush1.msra.mxu0 %v318
    %337 = vmatprep.subr.mxu0 0.0
    %338 = vmatpush1.msra.mxu0 0.0
    %339 = vmatprep.subr.mxu0 0.0
    %340 = vmatpush1.msra.mxu0 0.0
    %341 = vmatprep.subr.mxu0 0.0
    %342 = vmatpush1.msra.mxu0 0.0
    %343 = vmatprep.subr.mxu0 0.0
    %344 = vmatpush1.msra.mxu0 0.0
    %345 = vmatprep.subr.mxu0 0.0
    %346 = vmatpush1.msra.mxu0 0.0
    %347 = vmatprep.subr.mxu0 0.0
    %348 = vmatpush1.msra.mxu0 0.0
    %349 = vmatprep.subr.mxu0 0.0
    %350 = vmatpush1.msra.mxu0 0.0
    %351 = vmatprep.subr.mxu0 0.0
    %352 = vmatpush1.msra.mxu0 0.0
    %353 = vmatprep.subr.mxu0 0.0
    %354 = vmatpush1.msra.mxu0 0.0
    %355 = vmatprep.subr.mxu0 0.0
    %356 = vmatpush1.msra.mxu0 0.0
    %357 = vmatprep.subr.mxu0 0.0
    %358 = vmatpush1.msra.mxu0 0.0
    %359 = vmatprep.subr.mxu0 0.0
    %360 = vmatpush1.msra.mxu0 0.0
    %361 = vmatprep.subr.mxu0 0.0
    %362 = vmatpush1.msra.mxu0 0.0
    %363 = vmatprep.subr.mxu0 0.0
    %364 = vmatpush1.msra.mxu0 0.0
    %365 = vmatprep.subr.mxu0 0.0
    %366 = vmatpush1.msra.mxu0 0.0
    %367 = vmatprep.subr.mxu0 0.0
    %368 = vmatpush1.msra.mxu0 0.0
    %369 = vmatprep.subr.mxu0 0.0
    %370 = vmatpush1.msra.mxu0 0.0
    %371 = vmatprep.subr.mxu0 0.0
    %372 = vmatpush1.msra.mxu0 0.0
    %373 = vmatprep.subr.mxu0 0.0
    %374 = vmatpush1.msra.mxu0 0.0
    %375 = vmatprep.subr.mxu0 0.0
    %376 = vmatpush1.msra.mxu0 0.0
    %377 = vmatprep.subr.mxu0 0.0
    %378 = vmatpush1.msra.mxu0 0.0
    %379 = vmatprep.subr.mxu0 0.0
    %380 = vmatpush1.msra.mxu0 0.0
    %381 = vmatprep.subr.mxu0 0.0
    %382 = vmatpush1.msra.mxu0 0.0
    %383 = vmatprep.subr.mxu0 0.0
    %384 = vmatpush1.msra.mxu0 0.0
    %385 = vmatprep.subr.mxu0 0.0
    %386 = vmatpush1.msra.mxu0 0.0
    %387 = vmatprep.subr.mxu0 0.0
    %388 = vmatpush1.msra.mxu0 0.0
    %389 = vmatprep.subr.mxu0 0.0
    %390 = vmatpush1.msra.mxu0 0.0
    %391 = vmatprep.subr.mxu0 0.0
    %392 = vmatpush1.msra.mxu0 0.0
    %393 = vmatprep.mubr.f32.mxu0 0.0
    %394 = vmatmul.mubr.f32.gmra.mrb[0].mxu0 %v327
    %v395 = vpop.f32.mrb[0].mxu0
    %v396 = vadd.f32 %v324, %v395
    %v397 = vpop.f32.mrb[0].mxu0
    %398 = vdwg.mxu0
    %vm399 = vcmask 23552
    %400 = vst.msk [vmem:[%s9] sm:$0xff] %vm399, %v396
    // Predicated region
    $region46: #{mlp_forward.1} parent=1 // pred_check
      _
    $region47: #{mlp_forward.1} parent=1 // pred_check_branch
      %402 = sbr.rel (0) target = $region49
    $region48: #{mlp_forward.1} parent=1 // pred_region
      _
    $region49: #{mlp_forward.1} parent=1 // pred_fallthru
      _
    // Predicated region
    $region50: #{mlp_forward.1} parent=1 // pred_check
      _
    $region51: #{mlp_forward.1} parent=1 // pred_check_branch
      %404 = sbr.rel (0) target = $region53
    $region52: #{mlp_forward.1} parent=1 // pred_region
      _
    $region53: #{mlp_forward.1} parent=1 // pred_fallthru
      _
    %405 = vsyncpa [#allocation3], 1
    %406 = vsyncpa [#allocation5], 1

</llo_original>
